<compile_context>
chip_gen: v7x
topology: tpu7x:2x2x1
jax: 0.10.0
libtpu: 0.0.40
codegen_flags: <defaults>
</compile_context>

<pallas_src>
import functools

import jax
import jax.numpy as jnp
from jax import lax
from jax.experimental import pallas as pl
from jax.experimental.pallas import tpu as pltpu


_INV_SQRT2 = 0.7071067811865476


def _gelu_exact(x):
    # nn.GELU() default (approximate='none'): 0.5 * x * (1 + erf(x / sqrt(2)))
    return 0.5 * x * (1.0 + lax.erf(x * _INV_SQRT2))


def _round_up(x, m):
    return (x + m - 1) // m * m


def _tile_bytes(shape, dtype):
    """VMEM bytes of one buffer of `shape`, with (8, 128) layout padding."""
    dims = list(shape)
    if len(dims) >= 1:
        dims[-1] = _round_up(dims[-1], 128)
    if len(dims) >= 2:
        dims[-2] = _round_up(dims[-2], 8)
    n = 1
    for d in dims:
        n *= int(d)
    return n * jnp.dtype(dtype).itemsize


def _vmem_capacity_bytes():
    try:
        return int(pltpu.get_tpu_info().vmem_capacity_bytes)
    except Exception:
        return 64 << 20          # conservative default (v7x per-TC VMEM)


# ----------------------------------------------------------------------------
# kernels
# ----------------------------------------------------------------------------
def _fused_kernel(x_ref, w1_ref, b1_ref, w2_ref, b2_ref, w3_ref, b3_ref,
                  o_ref, acc_ref, *, inv_s):
    s = pl.program_id(1)

    @pl.when(s == 0)
    def _():
        acc_ref[...] = jnp.zeros_like(acc_ref)

    # Sequence-sum of this (tb, ts, D) tile; widen to f32 inside the reduction
    # (no full f32 copy of the x tile is materialized).
    acc_ref[...] += jnp.sum(x_ref[...], axis=1, dtype=jnp.float32)

    @pl.when(s == pl.num_programs(1) - 1)
    def _():
        # Mean over the true (un-padded) sequence length on the reduced tile.
        xm = acc_ref[...] * inv_s

        # Weights stay in their native dtype (bf16 -> MXU bf16 path);
        # accumulation is f32 via preferred_element_type.
        h1 = jnp.dot(xm.astype(w1_ref.dtype), w1_ref[...],
                     preferred_element_type=jnp.float32)
        h1 = _gelu_exact(h1 + b1_ref[...].astype(jnp.float32))

        h2 = jnp.dot(h1.astype(w2_ref.dtype), w2_ref[...],
                     preferred_element_type=jnp.float32)
        h2 = _gelu_exact(h2 + b2_ref[...].astype(jnp.float32))

        out = jnp.dot(h2.astype(w3_ref.dtype), w3_ref[...],
                      preferred_element_type=jnp.float32)
        o_ref[...] = (out + b3_ref[...].astype(jnp.float32)).astype(o_ref.dtype)


def _seq_mean_kernel(x_ref, o_ref, acc_ref, *, inv_s):
    # Reduction-only path (used when the MLP weights do not fit in VMEM).
    s = pl.program_id(1)

    @pl.when(s == 0)
    def _():
        acc_ref[...] = jnp.zeros_like(acc_ref)

    acc_ref[...] += jnp.sum(x_ref[...], axis=1, dtype=jnp.float32)

    @pl.when(s == pl.num_programs(1) - 1)
    def _():
        o_ref[...] = acc_ref[...] * inv_s


# ----------------------------------------------------------------------------
# wrapper
# ----------------------------------------------------------------------------
def property_predictor(x, params, *, tb=None, ts=None):
    """x: [B, S, D]. params: dict of weights/biases. Returns [B, P] float32."""
    B, S, D = x.shape
    P = params["w3"].shape[1]
    x_bytes = jnp.dtype(x.dtype).itemsize
    w_dtype = params["w1"].dtype

    cap = _vmem_capacity_bytes()
    # Usable VMEM per generation: ~48 MiB on v7x (64 MiB), ~96 MiB on v5e/v6e.
    usable = min(cap * 3 // 4, 96 << 20)

    Pp = _round_up(max(P, 1), 128)       # lane-dense output (unmasked vst)

    # ---- batch tile ---------------------------------------------------------
    if tb is None:
        tb = min(_round_up(B, 8), 256)
        if B >= 16:
            # keep >= 2 batch tiles so a second TensorCore (v7x) gets work
            tb = min(tb, max(8, _round_up((_round_up(B, 8) + 1) // 2, 8)))

    # Single-buffered (Buffered(1)) weight residency, plus out/acc tiles,
    # with (8,128) layout padding and real buffer counts.
    w_res = (_tile_bytes((D, 2 * D), w_dtype) + _tile_bytes((1, 2 * D), w_dtype)
             + _tile_bytes((2 * D, D), w_dtype) + _tile_bytes((1, D), w_dtype)
             + _tile_bytes((D, Pp), w_dtype) + _tile_bytes((1, Pp), w_dtype))
    acc_bytes = _tile_bytes((tb, D), jnp.float32)
    fused_fixed = w_res + acc_bytes + 2 * _tile_bytes((tb, Pp), jnp.float32)

    min_x = 2 * _tile_bytes((tb, 8, D), x.dtype)      # smallest useful x tiles
    use_fused = (fused_fixed + min_x) <= usable

    fixed = fused_fixed if use_fused else (
        acc_bytes + 2 * _tile_bytes((tb, D), jnp.float32))

    # ---- seq tile from the remaining (double-buffered x) budget -------------
    if ts is None:
        per_buf = max(usable - fixed, 0) // 2
        row_bytes = _round_up(D, 128) * x_bytes       # lane-padded row
        ts = per_buf // max(tb * row_bytes, 1)
        ts = max(8, (ts // 8) * 8)
        ts = min(ts, _round_up(S, 8))

    Bp = _round_up(B, tb)
    Sp = _round_up(S, ts)

    xp = x
    if (Bp, Sp) != (B, S):
        xp = jnp.pad(x, ((0, Bp - B), (0, Sp - S), (0, 0)))

    grid = (Bp // tb, Sp // ts)
    inv_s = float(1.0 / S)
    dims = ("parallel", "arbitrary")
    x_spec = pl.BlockSpec((tb, ts, D), lambda i, s: (i, s, 0))

    # ---- large-D fallback: reduction in Pallas, tiny [B, D] MLP in XLA ------
    if not use_fused:
        est = 2 * _tile_bytes((tb, ts, D), x.dtype) + fixed
        vmem_limit = int(min(max(est * 5 // 4 + (2 << 20), 16 << 20),
                             cap - (2 << 20)))
        mean = pl.pallas_call(
            functools.partial(_seq_mean_kernel, inv_s=inv_s),
            out_shape=jax.ShapeDtypeStruct((Bp, D), jnp.float32),
            grid_spec=pltpu.PrefetchScalarGridSpec(
                num_scalar_prefetch=0,
                grid=grid,
                in_specs=[x_spec],
                out_specs=pl.BlockSpec((tb, D), lambda i, s: (i, 0)),
                scratch_shapes=[pltpu.VMEM((tb, D), jnp.float32)],
            ),
            compiler_params=pltpu.CompilerParams(
                dimension_semantics=dims, vmem_limit_bytes=vmem_limit),
        )(xp)[:B]
        h = _gelu_exact(jnp.dot(mean.astype(w_dtype), params["w1"],
                                preferred_element_type=jnp.float32)
                        + params["b1"].astype(jnp.float32))
        h = _gelu_exact(jnp.dot(h.astype(w_dtype), params["w2"],
                                preferred_element_type=jnp.float32)
                        + params["b2"].astype(jnp.float32))
        return (jnp.dot(h.astype(w_dtype), params["w3"],
                        preferred_element_type=jnp.float32)
                + params["b3"].astype(jnp.float32))

    # ---- fused path ----------------------------------------------------------
    w3, b3 = params["w3"], params["b3"]
    if Pp != P:
        w3 = jnp.pad(w3, ((0, 0), (0, Pp - P)))
        b3 = jnp.pad(b3, ((0, 0), (0, Pp - P)))

    est = 2 * _tile_bytes((tb, ts, D), x.dtype) + fused_fixed
    vmem_limit = int(min(max(est * 5 // 4 + (2 << 20), 16 << 20),
                         cap - (2 << 20)))

    w_hbm_bytes = (params["w1"].size + params["b1"].size + params["w2"].size
                   + params["b2"].size + w3.size + b3.size) \
        * jnp.dtype(w_dtype).itemsize
    cost = pl.CostEstimate(
        flops=int(2 * B * (D * 2 * D + 2 * D * D + D * P) + B * S * D),
        transcendentals=int(B * 3 * D),
        bytes_accessed=int(B * S * D * x_bytes + w_hbm_bytes + B * P * 4),
    )

    def build_specs(single_buffer_weights):
        kw = dict(pipeline_mode=pl.Buffered(1)) if single_buffer_weights else {}
        return [
            x_spec,                                                  # x tile
            pl.BlockSpec((D, 2 * D), lambda i, s: (0, 0), **kw),     # w1
            pl.BlockSpec((1, 2 * D), lambda i, s: (0, 0), **kw),     # b1
            pl.BlockSpec((2 * D, D), lambda i, s: (0, 0), **kw),     # w2
            pl.BlockSpec((1, D), lambda i, s: (0, 0), **kw),         # b2
            pl.BlockSpec((D, Pp), lambda i, s: (0, 0), **kw),        # w3 (padded)
            pl.BlockSpec((1, Pp), lambda i, s: (0, 0), **kw),        # b3 (padded)
        ]

    last_err = None
    for single_buf in (True, False):
        try:
            out_padded = pl.pallas_call(
                functools.partial(_fused_kernel, inv_s=inv_s),
                out_shape=jax.ShapeDtypeStruct((Bp, Pp), jnp.float32),
                grid_spec=pltpu.PrefetchScalarGridSpec(
                    num_scalar_prefetch=0,
                    grid=grid,
                    in_specs=build_specs(single_buf),
                    out_specs=pl.BlockSpec((tb, Pp), lambda i, s: (i, 0)),
                    scratch_shapes=[pltpu.VMEM((tb, D), jnp.float32)],
                ),
                compiler_params=pltpu.CompilerParams(
                    dimension_semantics=dims, vmem_limit_bytes=vmem_limit),
                cost_estimate=cost,
            )(xp, params["w1"], params["b1"], params["w2"], params["b2"], w3, b3)
            return out_padded[:B, :P]
        except Exception as e:      # Buffered(1) unsupported -> default buffering
            last_err = e
    raise last_err


# ----------------------------------------------------------------------------
# init / reference / demo
# ----------------------------------------------------------------------------
def init_params(key, d_model, n_properties):
    k1, k2, k3 = jax.random.split(key, 3)

    def linear(k, fan_in, fan_out):
        kw, kb = jax.random.split(k)
        bound = 1.0 / jnp.sqrt(fan_in)
        w = jax.random.uniform(kw, (fan_in, fan_out), jnp.float32, -bound, bound)
        b = jax.random.uniform(kb, (1, fan_out), jnp.float32, -bound, bound)
        return w, b

    w1, b1 = linear(k1, d_model, 2 * d_model)
    w2, b2 = linear(k2, 2 * d_model, d_model)
    w3, b3 = linear(k3, d_model, n_properties)
    return {"w1": w1, "b1": b1, "w2": w2, "b2": b2, "w3": w3, "b3": b3}


def reference(x, p):
    xm = jnp.mean(x, axis=1)
    h = _gelu_exact(xm @ p["w1"] + p["b1"])
    h = _gelu_exact(h @ p["w2"] + p["b2"])
    return h @ p["w3"] + p["b3"]


if __name__ == "__main__":
    B, S, D, P = 2, 8, 32, 4   # batch, seq_len, d_model, n_properties

    key = jax.random.PRNGKey(0)
    kx, kp = jax.random.split(key)
    x = jax.random.normal(kx, (B, S, D), jnp.float32)
    params = init_params(kp, D, P)

    out = jax.block_until_ready(property_predictor(x, params))
    ref = reference(x, params)
    assert out.shape == (B, P), out.shape
    assert jnp.allclose(out, ref, atol=1e-4, rtol=1e-4), (out, ref)

    # bf16 weights/activations path (native MXU dtype on v5e/v6e/v7x).
    params_bf16 = {k: v.astype(jnp.bfloat16) for k, v in params.items()}
    out_bf16 = jax.block_until_ready(
        property_predictor(x.astype(jnp.bfloat16), params_bf16))
    assert out_bf16.shape == (B, P), out_bf16.shape
    assert bool(jnp.all(jnp.isfinite(out_bf16)))
    assert jnp.allclose(out_bf16, ref, atol=1e-1, rtol=1e-1), (out_bf16, ref)

    print("KERNEL_OK")
</pallas_src>

<mosaic_0001>
module attributes {stable_mosaic.version = 11 : i64} {
  func.func @_fused_kernel(%arg0: i32, %arg1: i32, %arg2: memref<8x8x32xf32, #tpu.memory_space<vmem>>, %arg3: memref<32x64xf32, #tpu.memory_space<vmem>>, %arg4: memref<1x64xf32, #tpu.memory_space<vmem>>, %arg5: memref<64x32xf32, #tpu.memory_space<vmem>>, %arg6: memref<1x32xf32, #tpu.memory_space<vmem>>, %arg7: memref<32x128xf32, #tpu.memory_space<vmem>>, %arg8: memref<1x128xf32, #tpu.memory_space<vmem>>, %arg9: memref<8x128xf32, #tpu.memory_space<vmem>>, %arg10: memref<8x32xf32, #tpu.memory_space<vmem>>) attributes {dimension_semantics = [#tpu.dimension_semantics<parallel>, #tpu.dimension_semantics<arbitrary>], iteration_bounds = array<i64: 1, 1>, scalar_prefetch = 0 : i64, scratch_operands = 1 : i64, tpu.core_type = #tpu.core_type<tc>, window_params = [{transform_indices = @transform_0, window_bounds = array<i64: 8, 8, 32>}, {pipeline_mode = #tpu.pipeline_mode<synchronous>, transform_indices = @transform_1, window_bounds = array<i64: 32, 64>}, {pipeline_mode = #tpu.pipeline_mode<synchronous>, transform_indices = @transform_2, window_bounds = array<i64: 1, 64>}, {pipeline_mode = #tpu.pipeline_mode<synchronous>, transform_indices = @transform_3, window_bounds = array<i64: 64, 32>}, {pipeline_mode = #tpu.pipeline_mode<synchronous>, transform_indices = @transform_4, window_bounds = array<i64: 1, 32>}, {pipeline_mode = #tpu.pipeline_mode<synchronous>, transform_indices = @transform_5, window_bounds = array<i64: 32, 128>}, {pipeline_mode = #tpu.pipeline_mode<synchronous>, transform_indices = @transform_6, window_bounds = array<i64: 1, 128>}, {transform_indices = @transform_7, window_bounds = array<i64: 8, 128>}]} {
    %c0_i32 = arith.constant 0 : i32
    %0 = arith.cmpi eq, %arg1, %c0_i32 : i32
    %1 = arith.extui %0 : i1 to i32
    %c0_i32_0 = arith.constant 0 : i32
    %2 = arith.cmpi ne, %1, %c0_i32_0 : i32
    scf.if %2 {
      %cst_9 = arith.constant 0.000000e+00 : f32
      %11 = vector.broadcast %cst_9 : f32 to vector<8x32xf32>
      %c0_10 = arith.constant 0 : index
      %c0_11 = arith.constant 0 : index
      %12 = vector.load %arg10[%c0_10, %c0_11] : memref<8x32xf32, #tpu.memory_space<vmem>>, vector<8x32xf32>
      tpu.vector_store %arg10[%c0_10, %c0_11], %11 {strides = array<i32>} : memref<8x32xf32, #tpu.memory_space<vmem>>, vector<8x32xf32>,
    } else {
    }
    %c0 = arith.constant 0 : index
    %c0_1 = arith.constant 0 : index
    %3 = vector.load %arg10[%c0, %c0_1] : memref<8x32xf32, #tpu.memory_space<vmem>>, vector<8x32xf32>
    %c0_2 = arith.constant 0 : index
    %c0_3 = arith.constant 0 : index
    %c0_4 = arith.constant 0 : index
    %4 = vector.load %arg2[%c0_2, %c0_3, %c0_4] : memref<8x8x32xf32, #tpu.memory_space<vmem>>, vector<8x8x32xf32>
    %cst = arith.constant dense<0.000000e+00> : vector<8x32xf32>
    %5 = vector.multi_reduction <add>, %4, %cst [1] : vector<8x8x32xf32> to vector<8x32xf32>
    %6 = arith.addf %3, %5 : vector<8x32xf32>
    %c0_5 = arith.constant 0 : index
    %c0_6 = arith.constant 0 : index
    %7 = vector.load %arg10[%c0_5, %c0_6] : memref<8x32xf32, #tpu.memory_space<vmem>>, vector<8x32xf32>
    tpu.vector_store %arg10[%c0_5, %c0_6], %6 {strides = array<i32>} : memref<8x32xf32, #tpu.memory_space<vmem>>, vector<8x32xf32>,
    %c0_i32_7 = arith.constant 0 : i32
    %8 = arith.cmpi eq, %arg1, %c0_i32_7 : i32
    %9 = arith.extui %8 : i1 to i32
    %c0_i32_8 = arith.constant 0 : i32
    %10 = arith.cmpi ne, %9, %c0_i32_8 : i32
    scf.if %10 {
      %c0_9 = arith.constant 0 : index
      %c0_10 = arith.constant 0 : index
      %11 = vector.load %arg10[%c0_9, %c0_10] : memref<8x32xf32, #tpu.memory_space<vmem>>, vector<8x32xf32>
      %cst_11 = arith.constant 1.250000e-01 : f32
      %12 = vector.broadcast %cst_11 : f32 to vector<8x32xf32>
      %13 = arith.mulf %11, %12 : vector<8x32xf32>
      %c0_12 = arith.constant 0 : index
      %c0_13 = arith.constant 0 : index
      %14 = vector.load %arg3[%c0_12, %c0_13] : memref<32x64xf32, #tpu.memory_space<vmem>>, vector<32x64xf32>
      %cst_14 = arith.constant dense<0.000000e+00> : vector<8x64xf32>
      %15 = tpu.matmul %13, %14, %cst_14 {dimension_numbers = #tpu.dot_dimension_numbers<[1], [0], [0], [1], [0, 0, 1, 1], [], []>} : vector<8x32xf32>, vector<32x64xf32>, vector<8x64xf32> -> vector<8x64xf32>
      %c0_15 = arith.constant 0 : index
      %c0_16 = arith.constant 0 : index
      %16 = vector.load %arg4[%c0_15, %c0_16] : memref<1x64xf32, #tpu.memory_space<vmem>>, vector<1x64xf32>
      %17 = vector.broadcast %16 : vector<1x64xf32> to vector<8x64xf32>
      %18 = arith.addf %15, %17 : vector<8x64xf32>
      %cst_17 = arith.constant 5.000000e-01 : f32
      %19 = vector.broadcast %cst_17 : f32 to vector<8x64xf32>
      %20 = arith.mulf %19, %18 : vector<8x64xf32>
      %cst_18 = arith.constant 0.707106769 : f32
      %21 = vector.broadcast %cst_18 : f32 to vector<8x64xf32>
      %22 = arith.mulf %18, %21 : vector<8x64xf32>
      %23 = math.erf %22 : vector<8x64xf32>
      %cst_19 = arith.constant 1.000000e+00 : f32
      %24 = vector.broadcast %cst_19 : f32 to vector<8x64xf32>
      %25 = arith.addf %24, %23 : vector<8x64xf32>
      %26 = arith.mulf %20, %25 : vector<8x64xf32>
      %c0_20 = arith.constant 0 : index
      %c0_21 = arith.constant 0 : index
      %27 = vector.load %arg5[%c0_20, %c0_21] : memref<64x32xf32, #tpu.memory_space<vmem>>, vector<64x32xf32>
      %cst_22 = arith.constant dense<0.000000e+00> : vector<8x32xf32>
      %28 = tpu.matmul %26, %27, %cst_22 {dimension_numbers = #tpu.dot_dimension_numbers<[1], [0], [0], [1], [0, 0, 1, 1], [], []>} : vector<8x64xf32>, vector<64x32xf32>, vector<8x32xf32> -> vector<8x32xf32>
      %c0_23 = arith.constant 0 : index
      %c0_24 = arith.constant 0 : index
      %29 = vector.load %arg6[%c0_23, %c0_24] : memref<1x32xf32, #tpu.memory_space<vmem>>, vector<1x32xf32>
      %30 = vector.broadcast %29 : vector<1x32xf32> to vector<8x32xf32>
      %31 = arith.addf %28, %30 : vector<8x32xf32>
      %cst_25 = arith.constant 5.000000e-01 : f32
      %32 = vector.broadcast %cst_25 : f32 to vector<8x32xf32>
      %33 = arith.mulf %32, %31 : vector<8x32xf32>
      %cst_26 = arith.constant 0.707106769 : f32
      %34 = vector.broadcast %cst_26 : f32 to vector<8x32xf32>
      %35 = arith.mulf %31, %34 : vector<8x32xf32>
      %36 = math.erf %35 : vector<8x32xf32>
      %cst_27 = arith.constant 1.000000e+00 : f32
      %37 = vector.broadcast %cst_27 : f32 to vector<8x32xf32>
      %38 = arith.addf %37, %36 : vector<8x32xf32>
      %39 = arith.mulf %33, %38 : vector<8x32xf32>
      %c0_28 = arith.constant 0 : index
      %c0_29 = arith.constant 0 : index
      %40 = vector.load %arg7[%c0_28, %c0_29] : memref<32x128xf32, #tpu.memory_space<vmem>>, vector<32x128xf32>
      %cst_30 = arith.constant dense<0.000000e+00> : vector<8x128xf32>
      %41 = tpu.matmul %39, %40, %cst_30 {dimension_numbers = #tpu.dot_dimension_numbers<[1], [0], [0], [1], [0, 0, 1, 1], [], []>} : vector<8x32xf32>, vector<32x128xf32>, vector<8x128xf32> -> vector<8x128xf32>
      %c0_31 = arith.constant 0 : index
      %c0_32 = arith.constant 0 : index
      %42 = vector.load %arg8[%c0_31, %c0_32] : memref<1x128xf32, #tpu.memory_space<vmem>>, vector<1x128xf32>
      %43 = vector.broadcast %42 : vector<1x128xf32> to vector<8x128xf32>
      %44 = arith.addf %41, %43 : vector<8x128xf32>
      %c0_33 = arith.constant 0 : index
      %c0_34 = arith.constant 0 : index
      %45 = vector.load %arg9[%c0_33, %c0_34] : memref<8x128xf32, #tpu.memory_space<vmem>>, vector<8x128xf32>
      tpu.vector_store %arg9[%c0_33, %c0_34], %44 {strides = array<i32>} : memref<8x128xf32, #tpu.memory_space<vmem>>, vector<8x128xf32>,
    } else {
    }
    return
  }
  func.func @transform_0(%arg0: i32, %arg1: i32) -> (i32, i32, i32) {
    %c0_i32 = arith.constant 0 : i32
    %c0_i32_0 = arith.constant 0 : i32
    return %arg0, %arg1, %c0_i32 : i32, i32, i32
  }
  func.func @transform_1(%arg0: i32, %arg1: i32) -> (i32, i32) {
    %c0_i32 = arith.constant 0 : i32
    %c0_i32_0 = arith.constant 0 : i32
    %c0_i32_1 = arith.constant 0 : i32
    return %c0_i32, %c0_i32_0 : i32, i32
  }
  func.func @transform_2(%arg0: i32, %arg1: i32) -> (i32, i32) {
    %c0_i32 = arith.constant 0 : i32
    %c0_i32_0 = arith.constant 0 : i32
    %c0_i32_1 = arith.constant 0 : i32
    return %c0_i32, %c0_i32_0 : i32, i32
  }
  func.func @transform_3(%arg0: i32, %arg1: i32) -> (i32, i32) {
    %c0_i32 = arith.constant 0 : i32
    %c0_i32_0 = arith.constant 0 : i32
    %c0_i32_1 = arith.constant 0 : i32
    return %c0_i32, %c0_i32_0 : i32, i32
  }
  func.func @transform_4(%arg0: i32, %arg1: i32) -> (i32, i32) {
    %c0_i32 = arith.constant 0 : i32
    %c0_i32_0 = arith.constant 0 : i32
    %c0_i32_1 = arith.constant 0 : i32
    return %c0_i32, %c0_i32_0 : i32, i32
  }
  func.func @transform_5(%arg0: i32, %arg1: i32) -> (i32, i32) {
    %c0_i32 = arith.constant 0 : i32
    %c0_i32_0 = arith.constant 0 : i32
    %c0_i32_1 = arith.constant 0 : i32
    return %c0_i32, %c0_i32_0 : i32, i32
  }
  func.func @transform_6(%arg0: i32, %arg1: i32) -> (i32, i32) {
    %c0_i32 = arith.constant 0 : i32
    %c0_i32_0 = arith.constant 0 : i32
    %c0_i32_1 = arith.constant 0 : i32
    return %c0_i32, %c0_i32_0 : i32, i32
  }
  func.func @transform_7(%arg0: i32, %arg1: i32) -> (i32, i32) {
    %c0_i32 = arith.constant 0 : i32
    %c0_i32_0 = arith.constant 0 : i32
    return %arg0, %c0_i32 : i32, i32
  }
}

module attributes {stable_mosaic.version = 11 : i64} {
  func.func @_fused_kernel(%arg0: i32, %arg1: i32, %arg2: memref<8x8x32xf32, #tpu.memory_space<vmem>>, %arg3: memref<32x64xf32, #tpu.memory_space<vmem>>, %arg4: memref<1x64xf32, #tpu.memory_space<vmem>>, %arg5: memref<64x32xf32, #tpu.memory_space<vmem>>, %arg6: memref<1x32xf32, #tpu.memory_space<vmem>>, %arg7: memref<32x128xf32, #tpu.memory_space<vmem>>, %arg8: memref<1x128xf32, #tpu.memory_space<vmem>>, %arg9: memref<8x128xf32, #tpu.memory_space<vmem>>, %arg10: memref<8x32xf32, #tpu.memory_space<vmem>>) attributes {dimension_semantics = [#tpu.dimension_semantics<parallel>, #tpu.dimension_semantics<arbitrary>], iteration_bounds = array<i64: 1, 1>, scalar_prefetch = 0 : i64, scratch_operands = 1 : i64, tpu.core_type = #tpu.core_type<tc>, window_params = [{transform_indices = @transform_0, window_bounds = array<i64: 8, 8, 32>}, {pipeline_mode = #tpu.pipeline_mode<synchronous>, transform_indices = @transform_1, window_bounds = array<i64: 32, 64>}, {pipeline_mode = #tpu.pipeline_mode<synchronous>, transform_indices = @transform_2, window_bounds = array<i64: 1, 64>}, {pipeline_mode = #tpu.pipeline_mode<synchronous>, transform_indices = @transform_3, window_bounds = array<i64: 64, 32>}, {pipeline_mode = #tpu.pipeline_mode<synchronous>, transform_indices = @transform_4, window_bounds = array<i64: 1, 32>}, {pipeline_mode = #tpu.pipeline_mode<synchronous>, transform_indices = @transform_5, window_bounds = array<i64: 32, 128>}, {pipeline_mode = #tpu.pipeline_mode<synchronous>, transform_indices = @transform_6, window_bounds = array<i64: 1, 128>}, {transform_indices = @transform_7, window_bounds = array<i64: 8, 128>}]} {
    %c0_i32 = arith.constant 0 : i32
    %0 = arith.cmpi eq, %arg1, %c0_i32 : i32
    %1 = arith.extui %0 : i1 to i32
    %c0_i32_0 = arith.constant 0 : i32
    %2 = arith.cmpi ne, %1, %c0_i32_0 : i32
    scf.if %2 {
      %cst_9 = arith.constant 0.000000e+00 : f32
      %11 = vector.broadcast %cst_9 : f32 to vector<8x32xf32>
      %c0_10 = arith.constant 0 : index
      %c0_11 = arith.constant 0 : index
      %12 = vector.load %arg10[%c0_10, %c0_11] : memref<8x32xf32, #tpu.memory_space<vmem>>, vector<8x32xf32>
      tpu.vector_store %arg10[%c0_10, %c0_11], %11 {strides = array<i32>} : memref<8x32xf32, #tpu.memory_space<vmem>>, vector<8x32xf32>,
    } else {
    }
    %c0 = arith.constant 0 : index
    %c0_1 = arith.constant 0 : index
    %3 = vector.load %arg10[%c0, %c0_1] : memref<8x32xf32, #tpu.memory_space<vmem>>, vector<8x32xf32>
    %c0_2 = arith.constant 0 : index
    %c0_3 = arith.constant 0 : index
    %c0_4 = arith.constant 0 : index
    %4 = vector.load %arg2[%c0_2, %c0_3, %c0_4] : memref<8x8x32xf32, #tpu.memory_space<vmem>>, vector<8x8x32xf32>
    %cst = arith.constant dense<0.000000e+00> : vector<8x32xf32>
    %5 = vector.multi_reduction <add>, %4, %cst [1] : vector<8x8x32xf32> to vector<8x32xf32>
    %6 = arith.addf %3, %5 : vector<8x32xf32>
    %c0_5 = arith.constant 0 : index
    %c0_6 = arith.constant 0 : index
    %7 = vector.load %arg10[%c0_5, %c0_6] : memref<8x32xf32, #tpu.memory_space<vmem>>, vector<8x32xf32>
    tpu.vector_store %arg10[%c0_5, %c0_6], %6 {strides = array<i32>} : memref<8x32xf32, #tpu.memory_space<vmem>>, vector<8x32xf32>,
    %c0_i32_7 = arith.constant 0 : i32
    %8 = arith.cmpi eq, %arg1, %c0_i32_7 : i32
    %9 = arith.extui %8 : i1 to i32
    %c0_i32_8 = arith.constant 0 : i32
    %10 = arith.cmpi ne, %9, %c0_i32_8 : i32
    scf.if %10 {
      %c0_9 = arith.constant 0 : index
      %c0_10 = arith.constant 0 : index
      %11 = vector.load %arg10[%c0_9, %c0_10] : memref<8x32xf32, #tpu.memory_space<vmem>>, vector<8x32xf32>
      %cst_11 = arith.constant 1.250000e-01 : f32
      %12 = vector.broadcast %cst_11 : f32 to vector<8x32xf32>
      %13 = arith.mulf %11, %12 : vector<8x32xf32>
      %c0_12 = arith.constant 0 : index
      %c0_13 = arith.constant 0 : index
      %14 = vector.load %arg3[%c0_12, %c0_13] : memref<32x64xf32, #tpu.memory_space<vmem>>, vector<32x64xf32>
      %cst_14 = arith.constant dense<0.000000e+00> : vector<8x64xf32>
      %15 = tpu.matmul %13, %14, %cst_14 {dimension_numbers = #tpu.dot_dimension_numbers<[1], [0], [0], [1], [0, 0, 1, 1], [], []>} : vector<8x32xf32>, vector<32x64xf32>, vector<8x64xf32> -> vector<8x64xf32>
      %c0_15 = arith.constant 0 : index
      %c0_16 = arith.constant 0 : index
      %16 = vector.load %arg4[%c0_15, %c0_16] : memref<1x64xf32, #tpu.memory_space<vmem>>, vector<1x64xf32>
      %17 = vector.broadcast %16 : vector<1x64xf32> to vector<8x64xf32>
      %18 = arith.addf %15, %17 : vector<8x64xf32>
      %cst_17 = arith.constant 5.000000e-01 : f32
      %19 = vector.broadcast %cst_17 : f32 to vector<8x64xf32>
      %20 = arith.mulf %19, %18 : vector<8x64xf32>
      %cst_18 = arith.constant 0.707106769 : f32
      %21 = vector.broadcast %cst_18 : f32 to vector<8x64xf32>
      %22 = arith.mulf %18, %21 : vector<8x64xf32>
      %23 = math.erf %22 : vector<8x64xf32>
      %cst_19 = arith.constant 1.000000e+00 : f32
      %24 = vector.broadcast %cst_19 : f32 to vector<8x64xf32>
      %25 = arith.addf %24, %23 : vector<8x64xf32>
      %26 = arith.mulf %20, %25 : vector<8x64xf32>
      %c0_20 = arith.constant 0 : index
      %c0_21 = arith.constant 0 : index
      %27 = vector.load %arg5[%c0_20, %c0_21] : memref<64x32xf32, #tpu.memory_space<vmem>>, vector<64x32xf32>
      %cst_22 = arith.constant dense<0.000000e+00> : vector<8x32xf32>
      %28 = tpu.matmul %26, %27, %cst_22 {dimension_numbers = #tpu.dot_dimension_numbers<[1], [0], [0], [1], [0, 0, 1, 1], [], []>} : vector<8x64xf32>, vector<64x32xf32>, vector<8x32xf32> -> vector<8x32xf32>
      %c0_23 = arith.constant 0 : index
      %c0_24 = arith.constant 0 : index
      %29 = vector.load %arg6[%c0_23, %c0_24] : memref<1x32xf32, #tpu.memory_space<vmem>>, vector<1x32xf32>
      %30 = vector.broadcast %29 : vector<1x32xf32> to vector<8x32xf32>
      %31 = arith.addf %28, %30 : vector<8x32xf32>
      %cst_25 = arith.constant 5.000000e-01 : f32
      %32 = vector.broadcast %cst_25 : f32 to vector<8x32xf32>
      %33 = arith.mulf %32, %31 : vector<8x32xf32>
      %cst_26 = arith.constant 0.707106769 : f32
      %34 = vector.broadcast %cst_26 : f32 to vector<8x32xf32>
      %35 = arith.mulf %31, %34 : vector<8x32xf32>
      %36 = math.erf %35 : vector<8x32xf32>
      %cst_27 = arith.constant 1.000000e+00 : f32
      %37 = vector.broadcast %cst_27 : f32 to vector<8x32xf32>
      %38 = arith.addf %37, %36 : vector<8x32xf32>
      %39 = arith.mulf %33, %38 : vector<8x32xf32>
      %c0_28 = arith.constant 0 : index
      %c0_29 = arith.constant 0 : index
      %40 = vector.load %arg7[%c0_28, %c0_29] : memref<32x128xf32, #tpu.memory_space<vmem>>, vector<32x128xf32>
      %cst_30 = arith.constant dense<0.000000e+00> : vector<8x128xf32>
      %41 = tpu.matmul %39, %40, %cst_30 {dimension_numbers = #tpu.dot_dimension_numbers<[1], [0], [0], [1], [0, 0, 1, 1], [], []>} : vector<8x32xf32>, vector<32x128xf32>, vector<8x128xf32> -> vector<8x128xf32>
      %c0_31 = arith.constant 0 : index
      %c0_32 = arith.constant 0 : index
      %42 = vector.load %arg8[%c0_31, %c0_32] : memref<1x128xf32, #tpu.memory_space<vmem>>, vector<1x128xf32>
      %43 = vector.broadcast %42 : vector<1x128xf32> to vector<8x128xf32>
      %44 = arith.addf %41, %43 : vector<8x128xf32>
      %c0_33 = arith.constant 0 : index
      %c0_34 = arith.constant 0 : index
      %45 = vector.load %arg9[%c0_33, %c0_34] : memref<8x128xf32, #tpu.memory_space<vmem>>, vector<8x128xf32>
      tpu.vector_store %arg9[%c0_33, %c0_34], %44 {strides = array<i32>} : memref<8x128xf32, #tpu.memory_space<vmem>>, vector<8x128xf32>,
    } else {
    }
    return
  }
  func.func @transform_0(%arg0: i32, %arg1: i32) -> (i32, i32, i32) {
    %c0_i32 = arith.constant 0 : i32
    %c0_i32_0 = arith.constant 0 : i32
    return %arg0, %arg1, %c0_i32 : i32, i32, i32
  }
  func.func @transform_1(%arg0: i32, %arg1: i32) -> (i32, i32) {
    %c0_i32 = arith.constant 0 : i32
    %c0_i32_0 = arith.constant 0 : i32
    %c0_i32_1 = arith.constant 0 : i32
    return %c0_i32, %c0_i32_0 : i32, i32
  }
  func.func @transform_2(%arg0: i32, %arg1: i32) -> (i32, i32) {
    %c0_i32 = arith.constant 0 : i32
    %c0_i32_0 = arith.constant 0 : i32
    %c0_i32_1 = arith.constant 0 : i32
    return %c0_i32, %c0_i32_0 : i32, i32
  }
  func.func @transform_3(%arg0: i32, %arg1: i32) -> (i32, i32) {
    %c0_i32 = arith.constant 0 : i32
    %c0_i32_0 = arith.constant 0 : i32
    %c0_i32_1 = arith.constant 0 : i32
    return %c0_i32, %c0_i32_0 : i32, i32
  }
  func.func @transform_4(%arg0: i32, %arg1: i32) -> (i32, i32) {
    %c0_i32 = arith.constant 0 : i32
    %c0_i32_0 = arith.constant 0 : i32
    %c0_i32_1 = arith.constant 0 : i32
    return %c0_i32, %c0_i32_0 : i32, i32
  }
  func.func @transform_5(%arg0: i32, %arg1: i32) -> (i32, i32) {
    %c0_i32 = arith.constant 0 : i32
    %c0_i32_0 = arith.constant 0 : i32
    %c0_i32_1 = arith.constant 0 : i32
    return %c0_i32, %c0_i32_0 : i32, i32
  }
  func.func @transform_6(%arg0: i32, %arg1: i32) -> (i32, i32) {
    %c0_i32 = arith.constant 0 : i32
    %c0_i32_0 = arith.constant 0 : i32
    %c0_i32_1 = arith.constant 0 : i32
    return %c0_i32, %c0_i32_0 : i32, i32
  }
  func.func @transform_7(%arg0: i32, %arg1: i32) -> (i32, i32) {
    %c0_i32 = arith.constant 0 : i32
    %c0_i32_0 = arith.constant 0 : i32
    return %arg0, %c0_i32 : i32, i32
  }
}

</mosaic_0001>

<llo_original>
// kernel: tpu_custom_call.1
$region0: #{tpu_custom_call.1}
  #allocation0 [shape = 'u32[]', space=smem, size = 0x4, offset = 0x4, fixed_abs, tag = 'smem constant byte address 0x4 - core index']
  #allocation1 [shape = 'u32[144,128]{1,0:T(1,128)}', space=vmem, size = 0x12000, scoped, tag = 'internal scratch']
  #allocation2 [shape = 'f32[8,32]{1,0:T(8,128)}', space=vmem, size = 0x1000, scoped, tag = 'scratch operand']
  %s0 = inlined_call_operand.vmem [shape: f32[8,8,32], index: 0, kind: input, shape index: {}]
  %s1 = inlined_call_operand.vmem [shape: f32[32,64], index: 1, kind: input, shape index: {}]
  %s2 = inlined_call_operand.vmem [shape: f32[1,64], index: 2, kind: input, shape index: {}]
  %s3 = inlined_call_operand.vmem [shape: f32[64,32], index: 3, kind: input, shape index: {}]
  %s4 = inlined_call_operand.vmem [shape: f32[1,32], index: 4, kind: input, shape index: {}]
  %s5 = inlined_call_operand.hbm [shape: f32[32,128], index: 5, kind: input, shape index: {}]
  %s6 = inlined_call_operand.vmem [shape: f32[1,128], index: 6, kind: input, shape index: {}]
  %s7 = inlined_call_operand.hbm [shape: f32[8,128], index: 7, kind: output, shape index: {}]
  %s8 = sld [smem:[#allocation0]]
  $region50: #{tpu_custom_call.1} parent=0
    _
  %s10 = ssub.s32 1, %s8
  %s11 = scalar_select 0, %s10, %s8
  $region1: #{tpu_custom_call.1} parent=0
    #allocation3 [shape = 'u8[16384]{0}', space=vmem, size = 0x4000, scoped, tag = 'input window, operand 5, single buffered']
    #allocation4 [shape = 's32[1]{0}', space=sflag, size = 0x4, scoped, tag = 'scoped memory for tpu_custom_call.1']
    #allocation5 [shape = 's32[1]{0}', space=sflag, size = 0x4, scoped, tag = 'scoped memory for tpu_custom_call.1']
    #allocation6 [shape = 'u8[4096]{0}', space=vmem, size = 0x1000, scoped, tag = 'output window, operand 0, single buffered']
    %12 = vsyncpa [#allocation4], 0
    %13 = vsyncpa [#allocation5], 0
    // Predicated region
    $region2: #{tpu_custom_call.1} parent=1 // pred_check
      _
    $region3: #{tpu_custom_call.1} parent=1 // pred_check_branch
      %15 = sbr.rel (0) target = $region5
    $region4: #{tpu_custom_call.1} parent=1 // pred_region
      _
    $region5: #{tpu_custom_call.1} parent=1 // pred_fallthru
      _
    // Predicated region
    $region6: #{tpu_custom_call.1} parent=1 // pred_check
      _
    $region7: #{tpu_custom_call.1} parent=1 // pred_check_branch
      %17 = sbr.rel (0) target = $region9
    $region8: #{tpu_custom_call.1} parent=1 // pred_region
      _
    $region9: #{tpu_custom_call.1} parent=1 // pred_fallthru
      _
    // Predicated region
    $region10: #{tpu_custom_call.1} parent=1 // pred_check
      _
    $region11: #{tpu_custom_call.1} parent=1 // pred_check_branch
      %19 = sbr.rel (0) target = $region13
    $region12: #{tpu_custom_call.1} parent=1 // pred_region
      _
    $region13: #{tpu_custom_call.1} parent=1 // pred_fallthru
      _
    // Predicated region
    $region14: #{tpu_custom_call.1} parent=1 // pred_check
      _
    $region15: #{tpu_custom_call.1} parent=1 // pred_check_branch
      %21 = sbr.rel (0) target = $region17
    $region16: #{tpu_custom_call.1} parent=1 // pred_region
      _
    $region17: #{tpu_custom_call.1} parent=1 // pred_fallthru
      _
    // Predicated region
    $region18: #{tpu_custom_call.1} parent=1 // pred_check
      _
    $region19: #{tpu_custom_call.1} parent=1 // pred_check_branch
      %23 = sbr.rel (0) target = $region21
    $region20: #{tpu_custom_call.1} parent=1 // pred_region
      _
    $region21: #{tpu_custom_call.1} parent=1 // pred_fallthru
      _
    // Predicated region
    $region22: #{tpu_custom_call.1} parent=1 // pred_check
      _
    $region23: #{tpu_custom_call.1} parent=1 // pred_check_branch
      %25 = sbr.rel (0) target = $region25
    $region24: #{tpu_custom_call.1} parent=1 // pred_region
      %s27 = ssub.s32 512, 512
      %28 = vsyncadd [#allocation4], %s27
      %s29 = sshll.u32 [#allocation3], 4
      %s30 = int_to_ptr.vmem [resolvable:$true] %s29
      %35 = dma.hbm_to_vmem [thread:$0]  %s5, 512, %s30, [#allocation4], 128, 128, 8
    $region25: #{tpu_custom_call.1} parent=1 // pred_fallthru
      _
    // Predicated region
    $region26: #{tpu_custom_call.1} parent=1 // pred_check
      _
    $region27: #{tpu_custom_call.1} parent=1 // pred_check_branch
      %37 = sbr.rel (0) target = $region29
    $region28: #{tpu_custom_call.1} parent=1 // pred_region
      _
    $region29: #{tpu_custom_call.1} parent=1 // pred_fallthru
      _
    // Predicated region
    $region30: #{tpu_custom_call.1} parent=1 // pred_check
      _
    $region31: #{tpu_custom_call.1} parent=1 // pred_check_branch
      %39 = sbr.rel (0) target = $region33
    $region32: #{tpu_custom_call.1} parent=1 // pred_region
      %40 = dma.done [#allocation4], 512
    $region33: #{tpu_custom_call.1} parent=1 // pred_fallthru
      _
    %p41 = scmp.eq.s32.totalorder 0, 0
    // Predicated region
    $region34: #{tpu_custom_call.1} parent=1 // pred_check
      %p42 = pneg %p41
    $region35: #{tpu_custom_call.1} parent=1 // pred_check_branch
      %44 = sbr.rel (%p42) target = $region37
    $region36: #{tpu_custom_call.1} parent=1 // pred_region
      %vm45 = vcmask 261120
      %46 = vst.msk [vmem:[#allocation2] sm:$0xff] %vm45, 0.0
    $region37: #{tpu_custom_call.1} parent=1 // pred_fallthru
      _
    %v47 = vld [vmem:[#allocation2] sm:$0xff]
    %v48 = vld [vmem:[%s0] sm:$0xff]
    %v49 = vld [vmem:[%s0 + $0x8] sm:$0xff]
    %v50 = vld [vmem:[%s0 + $0x10] sm:$0xff]
    %v51 = vld [vmem:[%s0 + $0x18] sm:$0xff]
    %v52 = vld [vmem:[%s0 + $0x20] sm:$0xff]
    %v53 = vld [vmem:[%s0 + $0x28] sm:$0xff]
    %v54 = vld [vmem:[%s0 + $0x30] sm:$0xff]
    %v55 = vld [vmem:[%s0 + $0x38] sm:$0xff]
    %vm56 = vcmask 261120
    %v57 = vsel %vm56, %v48, 0.0
    %v58 = vrot.slane %v57, 4
    %v59 = vadd.f32 %v57, %v58
    %v60 = vrot.slane %v59, 2
    %v61 = vadd.f32 %v59, %v60
    %v62 = vrot.slane %v61, 1
    %v63 = vadd.f32 %v61, %v62
    %v64 = vsel %vm56, %v49, 0.0
    %v65 = vrot.slane %v64, 4
    %v66 = vadd.f32 %v64, %v65
    %v67 = vrot.slane %v66, 2
    %v68 = vadd.f32 %v66, %v67
    %v69 = vrot.slane %v68, 1
    %v70 = vadd.f32 %v68, %v69
    %v71 = vsel %vm56, %v50, 0.0
    %v72 = vrot.slane %v71, 4
    %v73 = vadd.f32 %v71, %v72
    %v74 = vrot.slane %v73, 2
    %v75 = vadd.f32 %v73, %v74
    %v76 = vrot.slane %v75, 1
    %v77 = vadd.f32 %v75, %v76
    %v78 = vsel %vm56, %v51, 0.0
    %v79 = vrot.slane %v78, 4
    %v80 = vadd.f32 %v78, %v79
    %v81 = vrot.slane %v80, 2
    %v82 = vadd.f32 %v80, %v81
    %v83 = vrot.slane %v82, 1
    %v84 = vadd.f32 %v82, %v83
    %v85 = vsel %vm56, %v52, 0.0
    %v86 = vrot.slane %v85, 4
    %v87 = vadd.f32 %v85, %v86
    %v88 = vrot.slane %v87, 2
    %v89 = vadd.f32 %v87, %v88
    %v90 = vrot.slane %v89, 1
    %v91 = vadd.f32 %v89, %v90
    %v92 = vsel %vm56, %v53, 0.0
    %v93 = vrot.slane %v92, 4
    %v94 = vadd.f32 %v92, %v93
    %v95 = vrot.slane %v94, 2
    %v96 = vadd.f32 %v94, %v95
    %v97 = vrot.slane %v96, 1
    %v98 = vadd.f32 %v96, %v97
    %v99 = vsel %vm56, %v54, 0.0
    %v100 = vrot.slane %v99, 4
    %v101 = vadd.f32 %v99, %v100
    %v102 = vrot.slane %v101, 2
    %v103 = vadd.f32 %v101, %v102
    %v104 = vrot.slane %v103, 1
    %v105 = vadd.f32 %v103, %v104
    %v106 = vsel %vm56, %v55, 0.0
    %v107 = vrot.slane %v106, 4
    %v108 = vadd.f32 %v106, %v107
    %v109 = vrot.slane %v108, 2
    %v110 = vadd.f32 %v108, %v109
    %v111 = vrot.slane %v110, 1
    %v112 = vadd.f32 %v110, %v111
    %vm121 = vcmask 1041409
    %v122 = vsel %vm121, %v70, %v63
    %vm123 = vcmask 1042434
    %v124 = vsel %vm123, %v77, %v122
    %vm125 = vcmask 1043459
    %v126 = vsel %vm125, %v84, %v124
    %vm127 = vcmask 1044484
    %v128 = vsel %vm127, %v91, %v126
    %vm129 = vcmask 1045509
    %v130 = vsel %vm129, %v98, %v128
    %vm131 = vcmask 1046534
    %v132 = vsel %vm131, %v105, %v130
    %vm133 = vcmask 1047559
    %v134 = vsel %vm133, %v112, %v132
    %v136 = vadd.f32 %v47, %v134
    %137 = vst.msk [vmem:[#allocation2] sm:$0xff] %vm56, %v136
    // Predicated region
    $region38: #{tpu_custom_call.1} parent=1 // pred_check
      %p138 = pneg %p41
    $region39: #{tpu_custom_call.1} parent=1 // pred_check_branch
      %140 = sbr.rel (%p138) target = $region41
    $region40: #{tpu_custom_call.1} parent=1 // pred_region
      %v141 = vld [vmem:[#allocation2] sm:$0xff]
      %v142 = vmul.f32 %v141, 0.125
      %v143 = vld [vmem:[%s1] sm:$0xff]
      %v144 = vld [vmem:[%s1 + $0x8] sm:$0xff]
      %v145 = vld [vmem:[%s1 + $0x10] sm:$0xff]
      %v146 = vld [vmem:[%s1 + $0x18] sm:$0xff]
      %v147 = vld [vmem:[%s2] sm:$0x1]
      %v149 = vlaneseq
      %v150 = vshrl.u32 %v149, 7
      %v151 = vsub.s32 0, %v150
      %v152 = vrot.slane %v147, %v151
      %v155 = vsel %vm56, %v142, 0
      %157 = vmatprep.subr.mxu0 0.0
      %158 = vmatpush1.msra.mxu0 %v143
      %159 = vmatprep.subr.mxu0 0.0
      %160 = vmatpush1.msra.mxu0 %v144
      %161 = vmatprep.subr.mxu0 0.0
      %162 = vmatpush1.msra.mxu0 %v145
      %163 = vmatprep.subr.mxu0 0.0
      %164 = vmatpush1.msra.mxu0 %v146
      %165 = vmatprep.subr.mxu0 0.0
      %166 = vmatpush1.msra.mxu0 0.0
      %167 = vmatprep.subr.mxu0 0.0
      %168 = vmatpush1.msra.mxu0 0.0
      %169 = vmatprep.subr.mxu0 0.0
      %170 = vmatpush1.msra.mxu0 0.0
      %171 = vmatprep.subr.mxu0 0.0
      %172 = vmatpush1.msra.mxu0 0.0
      %173 = vmatprep.subr.mxu0 0.0
      %174 = vmatpush1.msra.mxu0 0.0
      %175 = vmatprep.subr.mxu0 0.0
      %176 = vmatpush1.msra.mxu0 0.0
      %177 = vmatprep.subr.mxu0 0.0
      %178 = vmatpush1.msra.mxu0 0.0
      %179 = vmatprep.subr.mxu0 0.0
      %180 = vmatpush1.msra.mxu0 0.0
      %181 = vmatprep.subr.mxu0 0.0
      %182 = vmatpush1.msra.mxu0 0.0
      %183 = vmatprep.subr.mxu0 0.0
      %184 = vmatpush1.msra.mxu0 0.0
      %185 = vmatprep.subr.mxu0 0.0
      %186 = vmatpush1.msra.mxu0 0.0
      %187 = vmatprep.subr.mxu0 0.0
      %188 = vmatpush1.msra.mxu0 0.0
      %189 = vmatprep.subr.mxu0 0.0
      %190 = vmatpush1.msra.mxu0 0.0
      %191 = vmatprep.subr.mxu0 0.0
      %192 = vmatpush1.msra.mxu0 0.0
      %193 = vmatprep.subr.mxu0 0.0
      %194 = vmatpush1.msra.mxu0 0.0
      %195 = vmatprep.subr.mxu0 0.0
      %196 = vmatpush1.msra.mxu0 0.0
      %197 = vmatprep.subr.mxu0 0.0
      %198 = vmatpush1.msra.mxu0 0.0
      %199 = vmatprep.subr.mxu0 0.0
      %200 = vmatpush1.msra.mxu0 0.0
      %201 = vmatprep.subr.mxu0 0.0
      %202 = vmatpush1.msra.mxu0 0.0
      %203 = vmatprep.subr.mxu0 0.0
      %204 = vmatpush1.msra.mxu0 0.0
      %205 = vmatprep.subr.mxu0 0.0
      %206 = vmatpush1.msra.mxu0 0.0
      %207 = vmatprep.subr.mxu0 0.0
      %208 = vmatpush1.msra.mxu0 0.0
      %209 = vmatprep.subr.mxu0 0.0
      %210 = vmatpush1.msra.mxu0 0.0
      %211 = vmatprep.subr.mxu0 0.0
      %212 = vmatpush1.msra.mxu0 0.0
      %213 = vmatprep.subr.mxu0 0.0
      %214 = vmatpush1.msra.mxu0 0.0
      %215 = vmatprep.subr.mxu0 0.0
      %216 = vmatpush1.msra.mxu0 0.0
      %217 = vmatprep.subr.mxu0 0.0
      %218 = vmatpush1.msra.mxu0 0.0
      %219 = vmatprep.subr.mxu0 0.0
      %220 = vmatpush1.msra.mxu0 0.0
      %221 = vmatprep.mubr.f32.mxu0 0.0
      %222 = vmatmul.mubr.f32.gmra.mrb[0].mxu0 %v155
      %v223 = vpop.f32.mrb[0].mxu0
      %v224 = vadd.f32 %v152, %v223
      %v225 = vpop.f32.mrb[0].mxu0
      %226 = vdwg.mxu0
      %v227 = vmul.f32 %v224, 0.5
      %v228 = vmul.f32 %v224, 0.70710677
      %v229 = verf.f32.pop %v228
      %v230 = vadd.f32 %v229, 1.0
      %v231 = vmul.f32 %v227, %v230
      %v232 = vld [vmem:[%s3] sm:$0xff]
      %v233 = vld [vmem:[%s3 + $0x8] sm:$0xff]
      %v234 = vld [vmem:[%s3 + $0x10] sm:$0xff]
      %v235 = vld [vmem:[%s3 + $0x18] sm:$0xff]
      %v236 = vld [vmem:[%s3 + $0x20] sm:$0xff]
      %v237 = vld [vmem:[%s3 + $0x28] sm:$0xff]
      %v238 = vld [vmem:[%s3 + $0x30] sm:$0xff]
      %v239 = vld [vmem:[%s3 + $0x38] sm:$0xff]
      %v240 = vld [vmem:[%s4] sm:$0x1]
      %v242 = vlaneseq
      %v243 = vshrl.u32 %v242, 7
      %v244 = vsub.s32 0, %v243
      %v245 = vrot.slane %v240, %v244
      %vm247 = vcmask 523264
      %v249 = vsel %vm247, %v231, 0
      %251 = vmatprep.subr.mxu0 0.0
      %252 = vmatpush1.msra.mxu0 %v232
      %253 = vmatprep.subr.mxu0 0.0
      %254 = vmatpush1.msra.mxu0 %v233
      %255 = vmatprep.subr.mxu0 0.0
      %256 = vmatpush1.msra.mxu0 %v234
      %257 = vmatprep.subr.mxu0 0.0
      %258 = vmatpush1.msra.mxu0 %v235
      %259 = vmatprep.subr.mxu0 0.0
      %260 = vmatpush1.msra.mxu0 %v236
      %261 = vmatprep.subr.mxu0 0.0
      %262 = vmatpush1.msra.mxu0 %v237
      %263 = vmatprep.subr.mxu0 0.0
      %264 = vmatpush1.msra.mxu0 %v238
      %265 = vmatprep.subr.mxu0 0.0
      %266 = vmatpush1.msra.mxu0 %v239
      %267 = vmatprep.subr.mxu0 0.0
      %268 = vmatpush1.msra.mxu0 0.0
      %269 = vmatprep.subr.mxu0 0.0
      %270 = vmatpush1.msra.mxu0 0.0
      %271 = vmatprep.subr.mxu0 0.0
      %272 = vmatpush1.msra.mxu0 0.0
      %273 = vmatprep.subr.mxu0 0.0
      %274 = vmatpush1.msra.mxu0 0.0
      %275 = vmatprep.subr.mxu0 0.0
      %276 = vmatpush1.msra.mxu0 0.0
      %277 = vmatprep.subr.mxu0 0.0
      %278 = vmatpush1.msra.mxu0 0.0
      %279 = vmatprep.subr.mxu0 0.0
      %280 = vmatpush1.msra.mxu0 0.0
      %281 = vmatprep.subr.mxu0 0.0
      %282 = vmatpush1.msra.mxu0 0.0
      %283 = vmatprep.subr.mxu0 0.0
      %284 = vmatpush1.msra.mxu0 0.0
      %285 = vmatprep.subr.mxu0 0.0
      %286 = vmatpush1.msra.mxu0 0.0
      %287 = vmatprep.subr.mxu0 0.0
      %288 = vmatpush1.msra.mxu0 0.0
      %289 = vmatprep.subr.mxu0 0.0
      %290 = vmatpush1.msra.mxu0 0.0
      %291 = vmatprep.subr.mxu0 0.0
      %292 = vmatpush1.msra.mxu0 0.0
      %293 = vmatprep.subr.mxu0 0.0
      %294 = vmatpush1.msra.mxu0 0.0
      %295 = vmatprep.subr.mxu0 0.0
      %296 = vmatpush1.msra.mxu0 0.0
      %297 = vmatprep.subr.mxu0 0.0
      %298 = vmatpush1.msra.mxu0 0.0
      %299 = vmatprep.subr.mxu0 0.0
      %300 = vmatpush1.msra.mxu0 0.0
      %301 = vmatprep.subr.mxu0 0.0
      %302 = vmatpush1.msra.mxu0 0.0
      %303 = vmatprep.subr.mxu0 0.0
      %304 = vmatpush1.msra.mxu0 0.0
      %305 = vmatprep.subr.mxu0 0.0
      %306 = vmatpush1.msra.mxu0 0.0
      %307 = vmatprep.subr.mxu0 0.0
      %308 = vmatpush1.msra.mxu0 0.0
      %309 = vmatprep.subr.mxu0 0.0
      %310 = vmatpush1.msra.mxu0 0.0
      %311 = vmatprep.subr.mxu0 0.0
      %312 = vmatpush1.msra.mxu0 0.0
      %313 = vmatprep.subr.mxu0 0.0
      %314 = vmatpush1.msra.mxu0 0.0
      %315 = vmatprep.mubr.f32.mxu0 0.0
      %316 = vmatmul.mubr.f32.gmra.mrb[0].mxu0 %v249
      %v317 = vpop.f32.mrb[0].mxu0
      %v318 = vadd.f32 %v245, %v317
      %v319 = vpop.f32.mrb[0].mxu0
      %320 = vdwg.mxu0
      %v321 = vmul.f32 %v318, 0.5
      %v322 = vmul.f32 %v318, 0.70710677
      %v323 = verf.f32.pop %v322
      %v324 = vadd.f32 %v323, 1.0
      %v325 = vmul.f32 %v321, %v324
      %v326 = vld [vmem:[#allocation3] sm:$0xff]
      %v327 = vld [vmem:[#allocation3 + $0x8] sm:$0xff]
      %v328 = vld [vmem:[#allocation3 + $0x10] sm:$0xff]
      %v329 = vld [vmem:[#allocation3 + $0x18] sm:$0xff]
      %v330 = vld [vmem:[%s6] sm:$0x1]
      %v332 = vlaneseq
      %v333 = vshrl.u32 %v332, 7
      %v334 = vsub.s32 0, %v333
      %v335 = vrot.slane %v330, %v334
      %v338 = vsel %vm56, %v325, 0
      %340 = vmatprep.subr.mxu0 0.0
      %341 = vmatpush1.msra.mxu0 %v326
      %342 = vmatprep.subr.mxu0 0.0
      %343 = vmatpush1.msra.mxu0 %v327
      %344 = vmatprep.subr.mxu0 0.0
      %345 = vmatpush1.msra.mxu0 %v328
      %346 = vmatprep.subr.mxu0 0.0
      %347 = vmatpush1.msra.mxu0 %v329
      %348 = vmatprep.subr.mxu0 0.0
      %349 = vmatpush1.msra.mxu0 0.0
      %350 = vmatprep.subr.mxu0 0.0
      %351 = vmatpush1.msra.mxu0 0.0
      %352 = vmatprep.subr.mxu0 0.0
      %353 = vmatpush1.msra.mxu0 0.0
      %354 = vmatprep.subr.mxu0 0.0
      %355 = vmatpush1.msra.mxu0 0.0
      %356 = vmatprep.subr.mxu0 0.0
      %357 = vmatpush1.msra.mxu0 0.0
      %358 = vmatprep.subr.mxu0 0.0
      %359 = vmatpush1.msra.mxu0 0.0
      %360 = vmatprep.subr.mxu0 0.0
      %361 = vmatpush1.msra.mxu0 0.0
      %362 = vmatprep.subr.mxu0 0.0
      %363 = vmatpush1.msra.mxu0 0.0
      %364 = vmatprep.subr.mxu0 0.0
      %365 = vmatpush1.msra.mxu0 0.0
      %366 = vmatprep.subr.mxu0 0.0
      %367 = vmatpush1.msra.mxu0 0.0
      %368 = vmatprep.subr.mxu0 0.0
      %369 = vmatpush1.msra.mxu0 0.0
      %370 = vmatprep.subr.mxu0 0.0
      %371 = vmatpush1.msra.mxu0 0.0
      %372 = vmatprep.subr.mxu0 0.0
      %373 = vmatpush1.msra.mxu0 0.0
      %374 = vmatprep.subr.mxu0 0.0
      %375 = vmatpush1.msra.mxu0 0.0
      %376 = vmatprep.subr.mxu0 0.0
      %377 = vmatpush1.msra.mxu0 0.0
      %378 = vmatprep.subr.mxu0 0.0
      %379 = vmatpush1.msra.mxu0 0.0
      %380 = vmatprep.subr.mxu0 0.0
      %381 = vmatpush1.msra.mxu0 0.0
      %382 = vmatprep.subr.mxu0 0.0
      %383 = vmatpush1.msra.mxu0 0.0
      %384 = vmatprep.subr.mxu0 0.0
      %385 = vmatpush1.msra.mxu0 0.0
      %386 = vmatprep.subr.mxu0 0.0
      %387 = vmatpush1.msra.mxu0 0.0
      %388 = vmatprep.subr.mxu0 0.0
      %389 = vmatpush1.msra.mxu0 0.0
      %390 = vmatprep.subr.mxu0 0.0
      %391 = vmatpush1.msra.mxu0 0.0
      %392 = vmatprep.subr.mxu0 0.0
      %393 = vmatpush1.msra.mxu0 0.0
      %394 = vmatprep.subr.mxu0 0.0
      %395 = vmatpush1.msra.mxu0 0.0
      %396 = vmatprep.subr.mxu0 0.0
      %397 = vmatpush1.msra.mxu0 0.0
      %398 = vmatprep.subr.mxu0 0.0
      %399 = vmatpush1.msra.mxu0 0.0
      %400 = vmatprep.subr.mxu0 0.0
      %401 = vmatpush1.msra.mxu0 0.0
      %402 = vmatprep.subr.mxu0 0.0
      %403 = vmatpush1.msra.mxu0 0.0
      %404 = vmatprep.mubr.f32.mxu0 0.0
      %405 = vmatmul.mubr.f32.gmra.mrb[0].mxu0 %v338
      %v406 = vpop.f32.mrb[0].mxu0
      %v407 = vadd.f32 %v335, %v406
      %v408 = vpop.f32.mrb[0].mxu0
      %409 = vdwg.mxu0
      %410 = vst [vmem:[#allocation6] sm:$0xff] %v407
    $region41: #{tpu_custom_call.1} parent=1 // pred_fallthru
      _
    // Predicated region
    $region42: #{tpu_custom_call.1} parent=1 // pred_check
      _
    $region43: #{tpu_custom_call.1} parent=1 // pred_check_branch
      %412 = sbr.rel (0) target = $region45
    $region44: #{tpu_custom_call.1} parent=1 // pred_region
      %s414 = ssub.s32 128, 128
      %415 = vsyncadd [#allocation5], %s414
      %s417 = sshll.u32 [#allocation6], 4
      %s418 = int_to_ptr.vmem [resolvable:$true] %s417
      %420 = dma.vmem_to_hbm [thread:$0]  %s418, 128, %s7, [#allocation5]
    $region45: #{tpu_custom_call.1} parent=1 // pred_fallthru
      _
    // Predicated region
    $region46: #{tpu_custom_call.1} parent=1 // pred_check
      _
    $region47: #{tpu_custom_call.1} parent=1 // pred_check_branch
      %422 = sbr.rel (0) target = $region49
    $region48: #{tpu_custom_call.1} parent=1 // pred_region
      %423 = dma.done [#allocation5], 128
    $region49: #{tpu_custom_call.1} parent=1 // pred_fallthru
      _
    %424 = vsyncpa [#allocation4], 1
    %425 = vsyncpa [#allocation5], 1

// kernel: tpu_custom_call.1
$region0: #{tpu_custom_call.1}
  #allocation0 [shape = 'u32[]', space=smem, size = 0x4, offset = 0x4, fixed_abs, tag = 'smem constant byte address 0x4 - core index']
  #allocation1 [shape = 'u32[144,128]{1,0:T(1,128)}', space=vmem, size = 0x12000, scoped, tag = 'internal scratch']
  #allocation2 [shape = 'f32[8,32]{1,0:T(8,128)}', space=vmem, size = 0x1000, scoped, tag = 'scratch operand']
  %s0 = inlined_call_operand.vmem [shape: f32[8,8,32], index: 0, kind: input, shape index: {}]
  %s1 = inlined_call_operand.vmem [shape: f32[32,64], index: 1, kind: input, shape index: {}]
  %s2 = inlined_call_operand.vmem [shape: f32[1,64], index: 2, kind: input, shape index: {}]
  %s3 = inlined_call_operand.vmem [shape: f32[64,32], index: 3, kind: input, shape index: {}]
  %s4 = inlined_call_operand.vmem [shape: f32[1,32], index: 4, kind: input, shape index: {}]
  %s5 = inlined_call_operand.hbm [shape: f32[32,128], index: 5, kind: input, shape index: {}]
  %s6 = inlined_call_operand.vmem [shape: f32[1,128], index: 6, kind: input, shape index: {}]
  %s7 = inlined_call_operand.hbm [shape: f32[8,128], index: 7, kind: output, shape index: {}]
  %s8 = sld [smem:[#allocation0]]
  $region50: #{tpu_custom_call.1} parent=0
    _
  %s10 = ssub.s32 1, %s8
  %s11 = scalar_select 0, %s10, %s8
  $region1: #{tpu_custom_call.1} parent=0
    #allocation3 [shape = 'u8[16384]{0}', space=vmem, size = 0x4000, scoped, tag = 'input window, operand 5, single buffered']
    #allocation4 [shape = 's32[1]{0}', space=sflag, size = 0x4, scoped, tag = 'scoped memory for tpu_custom_call.1']
    #allocation5 [shape = 's32[1]{0}', space=sflag, size = 0x4, scoped, tag = 'scoped memory for tpu_custom_call.1']
    #allocation6 [shape = 'u8[4096]{0}', space=vmem, size = 0x1000, scoped, tag = 'output window, operand 0, single buffered']
    %12 = vsyncpa [#allocation4], 0
    %13 = vsyncpa [#allocation5], 0
    // Predicated region
    $region2: #{tpu_custom_call.1} parent=1 // pred_check
      _
    $region3: #{tpu_custom_call.1} parent=1 // pred_check_branch
      %15 = sbr.rel (0) target = $region5
    $region4: #{tpu_custom_call.1} parent=1 // pred_region
      _
    $region5: #{tpu_custom_call.1} parent=1 // pred_fallthru
      _
    // Predicated region
    $region6: #{tpu_custom_call.1} parent=1 // pred_check
      _
    $region7: #{tpu_custom_call.1} parent=1 // pred_check_branch
      %17 = sbr.rel (0) target = $region9
    $region8: #{tpu_custom_call.1} parent=1 // pred_region
      _
    $region9: #{tpu_custom_call.1} parent=1 // pred_fallthru
      _
    // Predicated region
    $region10: #{tpu_custom_call.1} parent=1 // pred_check
      _
    $region11: #{tpu_custom_call.1} parent=1 // pred_check_branch
      %19 = sbr.rel (0) target = $region13
    $region12: #{tpu_custom_call.1} parent=1 // pred_region
      _
    $region13: #{tpu_custom_call.1} parent=1 // pred_fallthru
      _
    // Predicated region
    $region14: #{tpu_custom_call.1} parent=1 // pred_check
      _
    $region15: #{tpu_custom_call.1} parent=1 // pred_check_branch
      %21 = sbr.rel (0) target = $region17
    $region16: #{tpu_custom_call.1} parent=1 // pred_region
      _
    $region17: #{tpu_custom_call.1} parent=1 // pred_fallthru
      _
    // Predicated region
    $region18: #{tpu_custom_call.1} parent=1 // pred_check
      _
    $region19: #{tpu_custom_call.1} parent=1 // pred_check_branch
      %23 = sbr.rel (0) target = $region21
    $region20: #{tpu_custom_call.1} parent=1 // pred_region
      _
    $region21: #{tpu_custom_call.1} parent=1 // pred_fallthru
      _
    // Predicated region
    $region22: #{tpu_custom_call.1} parent=1 // pred_check
      _
    $region23: #{tpu_custom_call.1} parent=1 // pred_check_branch
      %25 = sbr.rel (0) target = $region25
    $region24: #{tpu_custom_call.1} parent=1 // pred_region
      %s27 = ssub.s32 512, 512
      %28 = vsyncadd [#allocation4], %s27
      %s29 = sshll.u32 [#allocation3], 4
      %s30 = int_to_ptr.vmem [resolvable:$true] %s29
      %35 = dma.hbm_to_vmem [thread:$0]  %s5, 512, %s30, [#allocation4], 128, 128, 8
    $region25: #{tpu_custom_call.1} parent=1 // pred_fallthru
      _
    // Predicated region
    $region26: #{tpu_custom_call.1} parent=1 // pred_check
      _
    $region27: #{tpu_custom_call.1} parent=1 // pred_check_branch
      %37 = sbr.rel (0) target = $region29
    $region28: #{tpu_custom_call.1} parent=1 // pred_region
      _
    $region29: #{tpu_custom_call.1} parent=1 // pred_fallthru
      _
    // Predicated region
    $region30: #{tpu_custom_call.1} parent=1 // pred_check
      _
    $region31: #{tpu_custom_call.1} parent=1 // pred_check_branch
      %39 = sbr.rel (0) target = $region33
    $region32: #{tpu_custom_call.1} parent=1 // pred_region
      %40 = dma.done [#allocation4], 512
    $region33: #{tpu_custom_call.1} parent=1 // pred_fallthru
      _
    %p41 = scmp.eq.s32.totalorder 0, 0
    // Predicated region
    $region34: #{tpu_custom_call.1} parent=1 // pred_check
      %p42 = pneg %p41
    $region35: #{tpu_custom_call.1} parent=1 // pred_check_branch
      %44 = sbr.rel (%p42) target = $region37
    $region36: #{tpu_custom_call.1} parent=1 // pred_region
      %vm45 = vcmask 261120
      %46 = vst.msk [vmem:[#allocation2] sm:$0xff] %vm45, 0.0
    $region37: #{tpu_custom_call.1} parent=1 // pred_fallthru
      _
    %v47 = vld [vmem:[#allocation2] sm:$0xff]
    %v48 = vld [vmem:[%s0] sm:$0xff]
    %v49 = vld [vmem:[%s0 + $0x8] sm:$0xff]
    %v50 = vld [vmem:[%s0 + $0x10] sm:$0xff]
    %v51 = vld [vmem:[%s0 + $0x18] sm:$0xff]
    %v52 = vld [vmem:[%s0 + $0x20] sm:$0xff]
    %v53 = vld [vmem:[%s0 + $0x28] sm:$0xff]
    %v54 = vld [vmem:[%s0 + $0x30] sm:$0xff]
    %v55 = vld [vmem:[%s0 + $0x38] sm:$0xff]
    %vm56 = vcmask 261120
    %v57 = vsel %vm56, %v48, 0.0
    %v58 = vrot.slane %v57, 4
    %v59 = vadd.f32 %v57, %v58
    %v60 = vrot.slane %v59, 2
    %v61 = vadd.f32 %v59, %v60
    %v62 = vrot.slane %v61, 1
    %v63 = vadd.f32 %v61, %v62
    %v64 = vsel %vm56, %v49, 0.0
    %v65 = vrot.slane %v64, 4
    %v66 = vadd.f32 %v64, %v65
    %v67 = vrot.slane %v66, 2
    %v68 = vadd.f32 %v66, %v67
    %v69 = vrot.slane %v68, 1
    %v70 = vadd.f32 %v68, %v69
    %v71 = vsel %vm56, %v50, 0.0
    %v72 = vrot.slane %v71, 4
    %v73 = vadd.f32 %v71, %v72
    %v74 = vrot.slane %v73, 2
    %v75 = vadd.f32 %v73, %v74
    %v76 = vrot.slane %v75, 1
    %v77 = vadd.f32 %v75, %v76
    %v78 = vsel %vm56, %v51, 0.0
    %v79 = vrot.slane %v78, 4
    %v80 = vadd.f32 %v78, %v79
    %v81 = vrot.slane %v80, 2
    %v82 = vadd.f32 %v80, %v81
    %v83 = vrot.slane %v82, 1
    %v84 = vadd.f32 %v82, %v83
    %v85 = vsel %vm56, %v52, 0.0
    %v86 = vrot.slane %v85, 4
    %v87 = vadd.f32 %v85, %v86
    %v88 = vrot.slane %v87, 2
    %v89 = vadd.f32 %v87, %v88
    %v90 = vrot.slane %v89, 1
    %v91 = vadd.f32 %v89, %v90
    %v92 = vsel %vm56, %v53, 0.0
    %v93 = vrot.slane %v92, 4
    %v94 = vadd.f32 %v92, %v93
    %v95 = vrot.slane %v94, 2
    %v96 = vadd.f32 %v94, %v95
    %v97 = vrot.slane %v96, 1
    %v98 = vadd.f32 %v96, %v97
    %v99 = vsel %vm56, %v54, 0.0
    %v100 = vrot.slane %v99, 4
    %v101 = vadd.f32 %v99, %v100
    %v102 = vrot.slane %v101, 2
    %v103 = vadd.f32 %v101, %v102
    %v104 = vrot.slane %v103, 1
    %v105 = vadd.f32 %v103, %v104
    %v106 = vsel %vm56, %v55, 0.0
    %v107 = vrot.slane %v106, 4
    %v108 = vadd.f32 %v106, %v107
    %v109 = vrot.slane %v108, 2
    %v110 = vadd.f32 %v108, %v109
    %v111 = vrot.slane %v110, 1
    %v112 = vadd.f32 %v110, %v111
    %vm121 = vcmask 1041409
    %v122 = vsel %vm121, %v70, %v63
    %vm123 = vcmask 1042434
    %v124 = vsel %vm123, %v77, %v122
    %vm125 = vcmask 1043459
    %v126 = vsel %vm125, %v84, %v124
    %vm127 = vcmask 1044484
    %v128 = vsel %vm127, %v91, %v126
    %vm129 = vcmask 1045509
    %v130 = vsel %vm129, %v98, %v128
    %vm131 = vcmask 1046534
    %v132 = vsel %vm131, %v105, %v130
    %vm133 = vcmask 1047559
    %v134 = vsel %vm133, %v112, %v132
    %v136 = vadd.f32 %v47, %v134
    %137 = vst.msk [vmem:[#allocation2] sm:$0xff] %vm56, %v136
    // Predicated region
    $region38: #{tpu_custom_call.1} parent=1 // pred_check
      %p138 = pneg %p41
    $region39: #{tpu_custom_call.1} parent=1 // pred_check_branch
      %140 = sbr.rel (%p138) target = $region41
    $region40: #{tpu_custom_call.1} parent=1 // pred_region
      %v141 = vld [vmem:[#allocation2] sm:$0xff]
      %v142 = vmul.f32 %v141, 0.125
      %v143 = vld [vmem:[%s1] sm:$0xff]
      %v144 = vld [vmem:[%s1 + $0x8] sm:$0xff]
      %v145 = vld [vmem:[%s1 + $0x10] sm:$0xff]
      %v146 = vld [vmem:[%s1 + $0x18] sm:$0xff]
      %v147 = vld [vmem:[%s2] sm:$0x1]
      %v149 = vlaneseq
      %v150 = vshrl.u32 %v149, 7
      %v151 = vsub.s32 0, %v150
      %v152 = vrot.slane %v147, %v151
      %v155 = vsel %vm56, %v142, 0
      %157 = vmatprep.subr.mxu0 0.0
      %158 = vmatpush1.msra.mxu0 %v143
      %159 = vmatprep.subr.mxu0 0.0
      %160 = vmatpush1.msra.mxu0 %v144
      %161 = vmatprep.subr.mxu0 0.0
      %162 = vmatpush1.msra.mxu0 %v145
      %163 = vmatprep.subr.mxu0 0.0
      %164 = vmatpush1.msra.mxu0 %v146
      %165 = vmatprep.subr.mxu0 0.0
      %166 = vmatpush1.msra.mxu0 0.0
      %167 = vmatprep.subr.mxu0 0.0
      %168 = vmatpush1.msra.mxu0 0.0
      %169 = vmatprep.subr.mxu0 0.0
      %170 = vmatpush1.msra.mxu0 0.0
      %171 = vmatprep.subr.mxu0 0.0
      %172 = vmatpush1.msra.mxu0 0.0
      %173 = vmatprep.subr.mxu0 0.0
      %174 = vmatpush1.msra.mxu0 0.0
      %175 = vmatprep.subr.mxu0 0.0
      %176 = vmatpush1.msra.mxu0 0.0
      %177 = vmatprep.subr.mxu0 0.0
      %178 = vmatpush1.msra.mxu0 0.0
      %179 = vmatprep.subr.mxu0 0.0
      %180 = vmatpush1.msra.mxu0 0.0
      %181 = vmatprep.subr.mxu0 0.0
      %182 = vmatpush1.msra.mxu0 0.0
      %183 = vmatprep.subr.mxu0 0.0
      %184 = vmatpush1.msra.mxu0 0.0
      %185 = vmatprep.subr.mxu0 0.0
      %186 = vmatpush1.msra.mxu0 0.0
      %187 = vmatprep.subr.mxu0 0.0
      %188 = vmatpush1.msra.mxu0 0.0
      %189 = vmatprep.subr.mxu0 0.0
      %190 = vmatpush1.msra.mxu0 0.0
      %191 = vmatprep.subr.mxu0 0.0
      %192 = vmatpush1.msra.mxu0 0.0
      %193 = vmatprep.subr.mxu0 0.0
      %194 = vmatpush1.msra.mxu0 0.0
      %195 = vmatprep.subr.mxu0 0.0
      %196 = vmatpush1.msra.mxu0 0.0
      %197 = vmatprep.subr.mxu0 0.0
      %198 = vmatpush1.msra.mxu0 0.0
      %199 = vmatprep.subr.mxu0 0.0
      %200 = vmatpush1.msra.mxu0 0.0
      %201 = vmatprep.subr.mxu0 0.0
      %202 = vmatpush1.msra.mxu0 0.0
      %203 = vmatprep.subr.mxu0 0.0
      %204 = vmatpush1.msra.mxu0 0.0
      %205 = vmatprep.subr.mxu0 0.0
      %206 = vmatpush1.msra.mxu0 0.0
      %207 = vmatprep.subr.mxu0 0.0
      %208 = vmatpush1.msra.mxu0 0.0
      %209 = vmatprep.subr.mxu0 0.0
      %210 = vmatpush1.msra.mxu0 0.0
      %211 = vmatprep.subr.mxu0 0.0
      %212 = vmatpush1.msra.mxu0 0.0
      %213 = vmatprep.subr.mxu0 0.0
      %214 = vmatpush1.msra.mxu0 0.0
      %215 = vmatprep.subr.mxu0 0.0
      %216 = vmatpush1.msra.mxu0 0.0
      %217 = vmatprep.subr.mxu0 0.0
      %218 = vmatpush1.msra.mxu0 0.0
      %219 = vmatprep.subr.mxu0 0.0
      %220 = vmatpush1.msra.mxu0 0.0
      %221 = vmatprep.mubr.f32.mxu0 0.0
      %222 = vmatmul.mubr.f32.gmra.mrb[0].mxu0 %v155
      %v223 = vpop.f32.mrb[0].mxu0
      %v224 = vadd.f32 %v152, %v223
      %v225 = vpop.f32.mrb[0].mxu0
      %226 = vdwg.mxu0
      %v227 = vmul.f32 %v224, 0.5
      %v228 = vmul.f32 %v224, 0.70710677
      %v229 = verf.f32.pop %v228
      %v230 = vadd.f32 %v229, 1.0
      %v231 = vmul.f32 %v227, %v230
      %v232 = vld [vmem:[%s3] sm:$0xff]
      %v233 = vld [vmem:[%s3 + $0x8] sm:$0xff]
      %v234 = vld [vmem:[%s3 + $0x10] sm:$0xff]
      %v235 = vld [vmem:[%s3 + $0x18] sm:$0xff]
      %v236 = vld [vmem:[%s3 + $0x20] sm:$0xff]
      %v237 = vld [vmem:[%s3 + $0x28] sm:$0xff]
      %v238 = vld [vmem:[%s3 + $0x30] sm:$0xff]
      %v239 = vld [vmem:[%s3 + $0x38] sm:$0xff]
      %v240 = vld [vmem:[%s4] sm:$0x1]
      %v242 = vlaneseq
      %v243 = vshrl.u32 %v242, 7
      %v244 = vsub.s32 0, %v243
      %v245 = vrot.slane %v240, %v244
      %vm247 = vcmask 523264
      %v249 = vsel %vm247, %v231, 0
      %251 = vmatprep.subr.mxu0 0.0
      %252 = vmatpush1.msra.mxu0 %v232
      %253 = vmatprep.subr.mxu0 0.0
      %254 = vmatpush1.msra.mxu0 %v233
      %255 = vmatprep.subr.mxu0 0.0
      %256 = vmatpush1.msra.mxu0 %v234
      %257 = vmatprep.subr.mxu0 0.0
      %258 = vmatpush1.msra.mxu0 %v235
      %259 = vmatprep.subr.mxu0 0.0
      %260 = vmatpush1.msra.mxu0 %v236
      %261 = vmatprep.subr.mxu0 0.0
      %262 = vmatpush1.msra.mxu0 %v237
      %263 = vmatprep.subr.mxu0 0.0
      %264 = vmatpush1.msra.mxu0 %v238
      %265 = vmatprep.subr.mxu0 0.0
      %266 = vmatpush1.msra.mxu0 %v239
      %267 = vmatprep.subr.mxu0 0.0
      %268 = vmatpush1.msra.mxu0 0.0
      %269 = vmatprep.subr.mxu0 0.0
      %270 = vmatpush1.msra.mxu0 0.0
      %271 = vmatprep.subr.mxu0 0.0
      %272 = vmatpush1.msra.mxu0 0.0
      %273 = vmatprep.subr.mxu0 0.0
      %274 = vmatpush1.msra.mxu0 0.0
      %275 = vmatprep.subr.mxu0 0.0
      %276 = vmatpush1.msra.mxu0 0.0
      %277 = vmatprep.subr.mxu0 0.0
      %278 = vmatpush1.msra.mxu0 0.0
      %279 = vmatprep.subr.mxu0 0.0
      %280 = vmatpush1.msra.mxu0 0.0
      %281 = vmatprep.subr.mxu0 0.0
      %282 = vmatpush1.msra.mxu0 0.0
      %283 = vmatprep.subr.mxu0 0.0
      %284 = vmatpush1.msra.mxu0 0.0
      %285 = vmatprep.subr.mxu0 0.0
      %286 = vmatpush1.msra.mxu0 0.0
      %287 = vmatprep.subr.mxu0 0.0
      %288 = vmatpush1.msra.mxu0 0.0
      %289 = vmatprep.subr.mxu0 0.0
      %290 = vmatpush1.msra.mxu0 0.0
      %291 = vmatprep.subr.mxu0 0.0
      %292 = vmatpush1.msra.mxu0 0.0
      %293 = vmatprep.subr.mxu0 0.0
      %294 = vmatpush1.msra.mxu0 0.0
      %295 = vmatprep.subr.mxu0 0.0
      %296 = vmatpush1.msra.mxu0 0.0
      %297 = vmatprep.subr.mxu0 0.0
      %298 = vmatpush1.msra.mxu0 0.0
      %299 = vmatprep.subr.mxu0 0.0
      %300 = vmatpush1.msra.mxu0 0.0
      %301 = vmatprep.subr.mxu0 0.0
      %302 = vmatpush1.msra.mxu0 0.0
      %303 = vmatprep.subr.mxu0 0.0
      %304 = vmatpush1.msra.mxu0 0.0
      %305 = vmatprep.subr.mxu0 0.0
      %306 = vmatpush1.msra.mxu0 0.0
      %307 = vmatprep.subr.mxu0 0.0
      %308 = vmatpush1.msra.mxu0 0.0
      %309 = vmatprep.subr.mxu0 0.0
      %310 = vmatpush1.msra.mxu0 0.0
      %311 = vmatprep.subr.mxu0 0.0
      %312 = vmatpush1.msra.mxu0 0.0
      %313 = vmatprep.subr.mxu0 0.0
      %314 = vmatpush1.msra.mxu0 0.0
      %315 = vmatprep.mubr.f32.mxu0 0.0
      %316 = vmatmul.mubr.f32.gmra.mrb[0].mxu0 %v249
      %v317 = vpop.f32.mrb[0].mxu0
      %v318 = vadd.f32 %v245, %v317
      %v319 = vpop.f32.mrb[0].mxu0
      %320 = vdwg.mxu0
      %v321 = vmul.f32 %v318, 0.5
      %v322 = vmul.f32 %v318, 0.70710677
      %v323 = verf.f32.pop %v322
      %v324 = vadd.f32 %v323, 1.0
      %v325 = vmul.f32 %v321, %v324
      %v326 = vld [vmem:[#allocation3] sm:$0xff]
      %v327 = vld [vmem:[#allocation3 + $0x8] sm:$0xff]
      %v328 = vld [vmem:[#allocation3 + $0x10] sm:$0xff]
      %v329 = vld [vmem:[#allocation3 + $0x18] sm:$0xff]
      %v330 = vld [vmem:[%s6] sm:$0x1]
      %v332 = vlaneseq
      %v333 = vshrl.u32 %v332, 7
      %v334 = vsub.s32 0, %v333
      %v335 = vrot.slane %v330, %v334
      %v338 = vsel %vm56, %v325, 0
      %340 = vmatprep.subr.mxu0 0.0
      %341 = vmatpush1.msra.mxu0 %v326
      %342 = vmatprep.subr.mxu0 0.0
      %343 = vmatpush1.msra.mxu0 %v327
      %344 = vmatprep.subr.mxu0 0.0
      %345 = vmatpush1.msra.mxu0 %v328
      %346 = vmatprep.subr.mxu0 0.0
      %347 = vmatpush1.msra.mxu0 %v329
      %348 = vmatprep.subr.mxu0 0.0
      %349 = vmatpush1.msra.mxu0 0.0
      %350 = vmatprep.subr.mxu0 0.0
      %351 = vmatpush1.msra.mxu0 0.0
      %352 = vmatprep.subr.mxu0 0.0
      %353 = vmatpush1.msra.mxu0 0.0
      %354 = vmatprep.subr.mxu0 0.0
      %355 = vmatpush1.msra.mxu0 0.0
      %356 = vmatprep.subr.mxu0 0.0
      %357 = vmatpush1.msra.mxu0 0.0
      %358 = vmatprep.subr.mxu0 0.0
      %359 = vmatpush1.msra.mxu0 0.0
      %360 = vmatprep.subr.mxu0 0.0
      %361 = vmatpush1.msra.mxu0 0.0
      %362 = vmatprep.subr.mxu0 0.0
      %363 = vmatpush1.msra.mxu0 0.0
      %364 = vmatprep.subr.mxu0 0.0
      %365 = vmatpush1.msra.mxu0 0.0
      %366 = vmatprep.subr.mxu0 0.0
      %367 = vmatpush1.msra.mxu0 0.0
      %368 = vmatprep.subr.mxu0 0.0
      %369 = vmatpush1.msra.mxu0 0.0
      %370 = vmatprep.subr.mxu0 0.0
      %371 = vmatpush1.msra.mxu0 0.0
      %372 = vmatprep.subr.mxu0 0.0
      %373 = vmatpush1.msra.mxu0 0.0
      %374 = vmatprep.subr.mxu0 0.0
      %375 = vmatpush1.msra.mxu0 0.0
      %376 = vmatprep.subr.mxu0 0.0
      %377 = vmatpush1.msra.mxu0 0.0
      %378 = vmatprep.subr.mxu0 0.0
      %379 = vmatpush1.msra.mxu0 0.0
      %380 = vmatprep.subr.mxu0 0.0
      %381 = vmatpush1.msra.mxu0 0.0
      %382 = vmatprep.subr.mxu0 0.0
      %383 = vmatpush1.msra.mxu0 0.0
      %384 = vmatprep.subr.mxu0 0.0
      %385 = vmatpush1.msra.mxu0 0.0
      %386 = vmatprep.subr.mxu0 0.0
      %387 = vmatpush1.msra.mxu0 0.0
      %388 = vmatprep.subr.mxu0 0.0
      %389 = vmatpush1.msra.mxu0 0.0
      %390 = vmatprep.subr.mxu0 0.0
      %391 = vmatpush1.msra.mxu0 0.0
      %392 = vmatprep.subr.mxu0 0.0
      %393 = vmatpush1.msra.mxu0 0.0
      %394 = vmatprep.subr.mxu0 0.0
      %395 = vmatpush1.msra.mxu0 0.0
      %396 = vmatprep.subr.mxu0 0.0
      %397 = vmatpush1.msra.mxu0 0.0
      %398 = vmatprep.subr.mxu0 0.0
      %399 = vmatpush1.msra.mxu0 0.0
      %400 = vmatprep.subr.mxu0 0.0
      %401 = vmatpush1.msra.mxu0 0.0
      %402 = vmatprep.subr.mxu0 0.0
      %403 = vmatpush1.msra.mxu0 0.0
      %404 = vmatprep.mubr.f32.mxu0 0.0
      %405 = vmatmul.mubr.f32.gmra.mrb[0].mxu0 %v338
      %v406 = vpop.f32.mrb[0].mxu0
      %v407 = vadd.f32 %v335, %v406
      %v408 = vpop.f32.mrb[0].mxu0
      %409 = vdwg.mxu0
      %410 = vst [vmem:[#allocation6] sm:$0xff] %v407
    $region41: #{tpu_custom_call.1} parent=1 // pred_fallthru
      _
    // Predicated region
    $region42: #{tpu_custom_call.1} parent=1 // pred_check
      _
    $region43: #{tpu_custom_call.1} parent=1 // pred_check_branch
      %412 = sbr.rel (0) target = $region45
    $region44: #{tpu_custom_call.1} parent=1 // pred_region
      %s414 = ssub.s32 128, 128
      %415 = vsyncadd [#allocation5], %s414
      %s417 = sshll.u32 [#allocation6], 4
      %s418 = int_to_ptr.vmem [resolvable:$true] %s417
      %420 = dma.vmem_to_hbm [thread:$0]  %s418, 128, %s7, [#allocation5]
    $region45: #{tpu_custom_call.1} parent=1 // pred_fallthru
      _
    // Predicated region
    $region46: #{tpu_custom_call.1} parent=1 // pred_check
      _
    $region47: #{tpu_custom_call.1} parent=1 // pred_check_branch
      %422 = sbr.rel (0) target = $region49
    $region48: #{tpu_custom_call.1} parent=1 // pred_region
      %423 = dma.done [#allocation5], 128
    $region49: #{tpu_custom_call.1} parent=1 // pred_fallthru
      _
    %424 = vsyncpa [#allocation4], 1
    %425 = vsyncpa [#allocation5], 1

</llo_original>
